<compile_context>
chip_gen: v7x
topology: tpu7x:2x2x1
jax: 0.10.0
libtpu: 0.0.40
codegen_flags: <defaults>
</compile_context>

<pallas_src>
import functools
import math

import jax
import jax.numpy as jnp
from jax.experimental import pallas as pl
from jax.experimental.pallas import tpu as pltpu


# ----------------------------- Pallas kernel -------------------------------

def _timestep_embedder_kernel(t_ref, w1_ref, b1_ref, w2_ref, b2_ref, o_ref, *,
                              half, max_period):
    # t_ref : (TR, 1) f32          TR = row tile of timesteps
    # w1    : (2*half, H), b1: (1, H)
    # w2    : (H, H),      b2: (1, H)
    # o_ref : (TR, H)
    t = t_ref[...].astype(jnp.float32)                                # (TR, 1)

    # Sinusoidal frequencies: exp(-ln(max_period) * i / half), i = 0..half-1.
    idx = jax.lax.broadcasted_iota(jnp.int32, (1, half), 1).astype(jnp.float32)
    freqs = jnp.exp(idx * (-math.log(max_period) / half))             # (1, half)

    args = t * freqs                                                  # (TR, half)
    cos_e = jnp.cos(args)
    sin_e = jnp.sin(args)

    # Linear1 without building the (TR, 2*half) concat: static row-split of w1
    # (half is a multiple of 8 -> sublane-aligned view, no copy) and two MXU
    # dots summed into one f32 accumulator.
    w1_cos = w1_ref[:half, :]                                         # (half, H)
    w1_sin = w1_ref[half:, :]                                         # (half, H)
    h = jnp.dot(cos_e.astype(w1_ref.dtype), w1_cos,
                preferred_element_type=jnp.float32)
    h = h + jnp.dot(sin_e.astype(w1_ref.dtype), w1_sin,
                    preferred_element_type=jnp.float32)
    h = h + b1_ref[...]                                               # (TR, H)

    h = h * jax.nn.sigmoid(h)                                         # SiLU (EUP)

    y = jnp.dot(h.astype(w2_ref.dtype), w2_ref[...],
                preferred_element_type=jnp.float32) + b2_ref[...]     # (TR, H)
    o_ref[...] = y.astype(o_ref.dtype)


# ----------------------------- wrapper --------------------------------------

def _round_up(x, m):
    return ((x + m - 1) // m) * m


def timestep_embedder(t, w1, b1, w2, b2, *, max_period=10000, row_tile=256):
    """t: (N,); w1: (F, H); b1: (H,); w2: (H, H); b2: (H,) -> (N, H)."""
    N = t.shape[0]
    F, H = w1.shape
    assert F % 2 == 0, "frequency_embedding_size must be even"
    # TODO(synk): odd frequency_embedding_size (extra zero column) not implemented.
    half = F // 2

    # Pad the (tiny) timestep axis up to a sublane-aligned row tile; padded
    # rows are computed (harmlessly, t=0) and sliced off afterwards.
    tr = min(row_tile, _round_up(N, 8))
    n_pad = _round_up(N, tr)
    t2d = jnp.zeros((n_pad, 1), jnp.float32).at[:N, 0].set(t.astype(jnp.float32))

    kernel = functools.partial(_timestep_embedder_kernel,
                               half=half, max_period=max_period)
    out = pl.pallas_call(
        kernel,
        out_shape=jax.ShapeDtypeStruct((n_pad, H), w1.dtype),
        grid=(pl.cdiv(n_pad, tr),),
        in_specs=[
            pl.BlockSpec((tr, 1), lambda i: (i, 0)),   # timesteps (row-tiled)
            pl.BlockSpec((F, H), lambda i: (0, 0)),    # w1, VMEM-resident
            pl.BlockSpec((1, H), lambda i: (0, 0)),    # b1
            pl.BlockSpec((H, H), lambda i: (0, 0)),    # w2, VMEM-resident
            pl.BlockSpec((1, H), lambda i: (0, 0)),    # b2
        ],
        out_specs=pl.BlockSpec((tr, H), lambda i: (i, 0)),
        compiler_params=pltpu.CompilerParams(
            dimension_semantics=("parallel",)),
    )(t2d, w1, b1.reshape(1, H), w2, b2.reshape(1, H))
    return out[:N]


# ----------------------------- reference (pure JAX) --------------------------

def reference_forward(t, w1, b1, w2, b2, freq_dim, max_period=10000):
    half = freq_dim // 2
    freqs = jnp.exp(-math.log(max_period)
                    * jnp.arange(half, dtype=jnp.float32) / half)
    args = t[:, None].astype(jnp.float32) * freqs[None]
    emb = jnp.concatenate([jnp.cos(args), jnp.sin(args)], axis=-1)
    h = emb @ w1 + b1
    h = h * jax.nn.sigmoid(h)                                         # SiLU
    return h @ w2 + b2


# ----------------------------- main ------------------------------------------

if __name__ == "__main__":
    N = 8                      # batch of timesteps
    freq_dim = 256             # frequency_embedding_size (module default)
    hidden = 128               # hidden_size (small, lane-dense)

    key = jax.random.PRNGKey(0)
    kt, k1, k2, k3, k4 = jax.random.split(key, 5)

    # Diffusion-style (possibly fractional) timesteps in [0, 1000).
    t = jax.random.uniform(kt, (N,), jnp.float32, 0.0, 1000.0)

    s = 0.05
    w1 = s * jax.random.normal(k1, (freq_dim, hidden), dtype=jnp.float32)
    b1 = s * jax.random.normal(k2, (hidden,), dtype=jnp.float32)
    w2 = s * jax.random.normal(k3, (hidden, hidden), dtype=jnp.float32)
    b2 = s * jax.random.normal(k4, (hidden,), dtype=jnp.float32)

    y = timestep_embedder(t, w1, b1, w2, b2)
    y = jax.block_until_ready(y)

    y_ref = reference_forward(t, w1, b1, w2, b2, freq_dim)
    assert y.shape == (N, hidden)
    assert jnp.allclose(y, y_ref, atol=2e-3, rtol=2e-3), "mismatch vs reference"

    print("KERNEL_OK")
</pallas_src>

<mosaic_0001>
module attributes {stable_mosaic.version = 11 : i64} {
  func.func @_timestep_embedder_kernel(%arg0: i32, %arg1: memref<8x1xf32, #tpu.memory_space<vmem>>, %arg2: memref<256x128xf32, #tpu.memory_space<vmem>>, %arg3: memref<1x128xf32, #tpu.memory_space<vmem>>, %arg4: memref<128x128xf32, #tpu.memory_space<vmem>>, %arg5: memref<1x128xf32, #tpu.memory_space<vmem>>, %arg6: memref<8x128xf32, #tpu.memory_space<vmem>>) attributes {dimension_semantics = [#tpu.dimension_semantics<parallel>], iteration_bounds = array<i64: 1>, scalar_prefetch = 0 : i64, scratch_operands = 0 : i64, tpu.core_type = #tpu.core_type<tc>, window_params = [{transform_indices = @transform_0, window_bounds = array<i64: 8, 1>}, {pipeline_mode = #tpu.pipeline_mode<synchronous>, transform_indices = @transform_1, window_bounds = array<i64: 256, 128>}, {pipeline_mode = #tpu.pipeline_mode<synchronous>, transform_indices = @transform_2, window_bounds = array<i64: 1, 128>}, {pipeline_mode = #tpu.pipeline_mode<synchronous>, transform_indices = @transform_3, window_bounds = array<i64: 128, 128>}, {pipeline_mode = #tpu.pipeline_mode<synchronous>, transform_indices = @transform_4, window_bounds = array<i64: 1, 128>}, {transform_indices = @transform_5, window_bounds = array<i64: 8, 128>}]} {
    %c0 = arith.constant 0 : index
    %c0_0 = arith.constant 0 : index
    %0 = vector.load %arg1[%c0, %c0_0] : memref<8x1xf32, #tpu.memory_space<vmem>>, vector<8x1xf32>
    %1 = tpu.iota {dimensions = array<i32: 1>} : vector<1x128xi32>
    %2 = arith.sitofp %1 : vector<1x128xi32> to vector<1x128xf32>
    %cst = arith.constant -0.0719557852 : f32
    %3 = vector.broadcast %cst : f32 to vector<1x128xf32>
    %4 = arith.mulf %2, %3 : vector<1x128xf32>
    %5 = math.exp %4 : vector<1x128xf32>
    %6 = vector.broadcast %0 : vector<8x1xf32> to vector<8x128xf32>
    %7 = vector.broadcast %5 : vector<1x128xf32> to vector<8x128xf32>
    %8 = arith.mulf %6, %7 : vector<8x128xf32>
    %9 = math.cos %8 : vector<8x128xf32>
    %10 = math.sin %8 : vector<8x128xf32>
    %c0_1 = arith.constant 0 : index
    %c0_2 = arith.constant 0 : index
    %11 = vector.load %arg2[%c0_1, %c0_2] : memref<256x128xf32, #tpu.memory_space<vmem>>, vector<128x128xf32>
    %c128 = arith.constant 128 : index
    %c0_3 = arith.constant 0 : index
    %12 = vector.load %arg2[%c128, %c0_3] : memref<256x128xf32, #tpu.memory_space<vmem>>, vector<128x128xf32>
    %cst_4 = arith.constant dense<0.000000e+00> : vector<8x128xf32>
    %13 = tpu.matmul %9, %11, %cst_4 {dimension_numbers = #tpu.dot_dimension_numbers<[1], [0], [0], [1], [0, 0, 1, 1], [], []>} : vector<8x128xf32>, vector<128x128xf32>, vector<8x128xf32> -> vector<8x128xf32>
    %cst_5 = arith.constant dense<0.000000e+00> : vector<8x128xf32>
    %14 = tpu.matmul %10, %12, %cst_5 {dimension_numbers = #tpu.dot_dimension_numbers<[1], [0], [0], [1], [0, 0, 1, 1], [], []>} : vector<8x128xf32>, vector<128x128xf32>, vector<8x128xf32> -> vector<8x128xf32>
    %15 = arith.addf %13, %14 : vector<8x128xf32>
    %c0_6 = arith.constant 0 : index
    %c0_7 = arith.constant 0 : index
    %16 = vector.load %arg3[%c0_6, %c0_7] : memref<1x128xf32, #tpu.memory_space<vmem>>, vector<1x128xf32>
    %17 = vector.broadcast %16 : vector<1x128xf32> to vector<8x128xf32>
    %18 = arith.addf %15, %17 : vector<8x128xf32>
    %19 = arith.negf %18 : vector<8x128xf32>
    %20 = math.exp %19 : vector<8x128xf32>
    %cst_8 = arith.constant 1.000000e+00 : f32
    %21 = vector.broadcast %cst_8 : f32 to vector<8x128xf32>
    %22 = arith.addf %21, %20 : vector<8x128xf32>
    %23 = arith.divf %21, %22 : vector<8x128xf32>
    %24 = arith.mulf %18, %23 : vector<8x128xf32>
    %c0_9 = arith.constant 0 : index
    %c0_10 = arith.constant 0 : index
    %25 = vector.load %arg4[%c0_9, %c0_10] : memref<128x128xf32, #tpu.memory_space<vmem>>, vector<128x128xf32>
    %cst_11 = arith.constant dense<0.000000e+00> : vector<8x128xf32>
    %26 = tpu.matmul %24, %25, %cst_11 {dimension_numbers = #tpu.dot_dimension_numbers<[1], [0], [0], [1], [0, 0, 1, 1], [], []>} : vector<8x128xf32>, vector<128x128xf32>, vector<8x128xf32> -> vector<8x128xf32>
    %c0_12 = arith.constant 0 : index
    %c0_13 = arith.constant 0 : index
    %27 = vector.load %arg5[%c0_12, %c0_13] : memref<1x128xf32, #tpu.memory_space<vmem>>, vector<1x128xf32>
    %28 = vector.broadcast %27 : vector<1x128xf32> to vector<8x128xf32>
    %29 = arith.addf %26, %28 : vector<8x128xf32>
    %c0_14 = arith.constant 0 : index
    %c0_15 = arith.constant 0 : index
    %30 = vector.load %arg6[%c0_14, %c0_15] : memref<8x128xf32, #tpu.memory_space<vmem>>, vector<8x128xf32>
    tpu.vector_store %arg6[%c0_14, %c0_15], %29 {strides = array<i32>} : memref<8x128xf32, #tpu.memory_space<vmem>>, vector<8x128xf32>,
    return
  }
  func.func @transform_0(%arg0: i32) -> (i32, i32) {
    %c0_i32 = arith.constant 0 : i32
    %c0_i32_0 = arith.constant 0 : i32
    return %arg0, %c0_i32 : i32, i32
  }
  func.func @transform_1(%arg0: i32) -> (i32, i32) {
    %c0_i32 = arith.constant 0 : i32
    %c0_i32_0 = arith.constant 0 : i32
    %c0_i32_1 = arith.constant 0 : i32
    return %c0_i32, %c0_i32_0 : i32, i32
  }
  func.func @transform_2(%arg0: i32) -> (i32, i32) {
    %c0_i32 = arith.constant 0 : i32
    %c0_i32_0 = arith.constant 0 : i32
    %c0_i32_1 = arith.constant 0 : i32
    return %c0_i32, %c0_i32_0 : i32, i32
  }
  func.func @transform_3(%arg0: i32) -> (i32, i32) {
    %c0_i32 = arith.constant 0 : i32
    %c0_i32_0 = arith.constant 0 : i32
    %c0_i32_1 = arith.constant 0 : i32
    return %c0_i32, %c0_i32_0 : i32, i32
  }
  func.func @transform_4(%arg0: i32) -> (i32, i32) {
    %c0_i32 = arith.constant 0 : i32
    %c0_i32_0 = arith.constant 0 : i32
    %c0_i32_1 = arith.constant 0 : i32
    return %c0_i32, %c0_i32_0 : i32, i32
  }
  func.func @transform_5(%arg0: i32) -> (i32, i32) {
    %c0_i32 = arith.constant 0 : i32
    %c0_i32_0 = arith.constant 0 : i32
    return %arg0, %c0_i32 : i32, i32
  }
}

</mosaic_0001>

<llo_original>
// kernel: tpu_custom_call.1
$region0: #{tpu_custom_call.1}
  #allocation0 [shape = 'u32[]', space=smem, size = 0x4, offset = 0x4, fixed_abs, tag = 'smem constant byte address 0x4 - core index']
  #allocation1 [shape = 'u32[144,128]{1,0:T(1,128)}', space=vmem, size = 0x12000, scoped, tag = 'internal scratch']
  %s0 = inlined_call_operand.vmem [shape: f32[8,1], index: 0, kind: input, shape index: {}]
  %s1 = inlined_call_operand.hbm [shape: f32[256,128], index: 1, kind: input, shape index: {}]
  %s2 = inlined_call_operand.vmem [shape: f32[1,128], index: 2, kind: input, shape index: {}]
  %s3 = inlined_call_operand.hbm [shape: f32[128,128], index: 3, kind: input, shape index: {}]
  %s4 = inlined_call_operand.vmem [shape: f32[1,128], index: 4, kind: input, shape index: {}]
  %s5 = inlined_call_operand.hbm [shape: f32[8,128], index: 5, kind: output, shape index: {}]
  %s6 = sld [smem:[#allocation0]]
  $region38: #{tpu_custom_call.1} parent=0
    _
  %s8 = ssub.s32 1, %s6
  %s9 = scalar_select 0, %s8, %s6
  $region1: #{tpu_custom_call.1} parent=0
    #allocation2 [shape = 'u8[131072]{0}', space=vmem, size = 0x20000, scoped, tag = 'input window, operand 1, single buffered']
    #allocation3 [shape = 's32[1]{0}', space=sflag, size = 0x4, scoped, tag = 'scoped memory for tpu_custom_call.1']
    #allocation4 [shape = 's32[1]{0}', space=sflag, size = 0x4, scoped, tag = 'scoped memory for tpu_custom_call.1']
    #allocation5 [shape = 'u8[65536]{0}', space=vmem, size = 0x10000, scoped, tag = 'input window, operand 3, single buffered']
    #allocation6 [shape = 's32[1]{0}', space=sflag, size = 0x4, scoped, tag = 'scoped memory for tpu_custom_call.1']
    #allocation7 [shape = 'u8[4096]{0}', space=vmem, size = 0x1000, scoped, tag = 'output window, operand 0, single buffered']
    %10 = vsyncpa [#allocation3], 0
    %11 = vsyncpa [#allocation6], 0
    %12 = vsyncpa [#allocation4], 0
    // Predicated region
    $region2: #{tpu_custom_call.1} parent=1 // pred_check
      _
    $region3: #{tpu_custom_call.1} parent=1 // pred_check_branch
      %14 = sbr.rel (0) target = $region5
    $region4: #{tpu_custom_call.1} parent=1 // pred_region
      _
    $region5: #{tpu_custom_call.1} parent=1 // pred_fallthru
      _
    // Predicated region
    $region6: #{tpu_custom_call.1} parent=1 // pred_check
      _
    $region7: #{tpu_custom_call.1} parent=1 // pred_check_branch
      %16 = sbr.rel (0) target = $region9
    $region8: #{tpu_custom_call.1} parent=1 // pred_region
      %s18 = ssub.s32 4096, 4096
      %19 = vsyncadd [#allocation3], %s18
      %s20 = sshll.u32 [#allocation2], 4
      %s21 = int_to_ptr.vmem [resolvable:$true] %s20
      %26 = dma.hbm_to_vmem [thread:$0]  %s1, 4096, %s21, [#allocation3], 128, 128, 8
    $region9: #{tpu_custom_call.1} parent=1 // pred_fallthru
      _
    // Predicated region
    $region10: #{tpu_custom_call.1} parent=1 // pred_check
      _
    $region11: #{tpu_custom_call.1} parent=1 // pred_check_branch
      %28 = sbr.rel (0) target = $region13
    $region12: #{tpu_custom_call.1} parent=1 // pred_region
      _
    $region13: #{tpu_custom_call.1} parent=1 // pred_fallthru
      _
    // Predicated region
    $region14: #{tpu_custom_call.1} parent=1 // pred_check
      _
    $region15: #{tpu_custom_call.1} parent=1 // pred_check_branch
      %30 = sbr.rel (0) target = $region17
    $region16: #{tpu_custom_call.1} parent=1 // pred_region
      %s32 = ssub.s32 2048, 2048
      %33 = vsyncadd [#allocation6], %s32
      %s34 = sshll.u32 [#allocation5], 4
      %s35 = int_to_ptr.vmem [resolvable:$true] %s34
      %40 = dma.hbm_to_vmem [thread:$0]  %s3, 2048, %s35, [#allocation6], 128, 128, 8
    $region17: #{tpu_custom_call.1} parent=1 // pred_fallthru
      _
    // Predicated region
    $region18: #{tpu_custom_call.1} parent=1 // pred_check
      _
    $region19: #{tpu_custom_call.1} parent=1 // pred_check_branch
      %42 = sbr.rel (0) target = $region21
    $region20: #{tpu_custom_call.1} parent=1 // pred_region
      _
    $region21: #{tpu_custom_call.1} parent=1 // pred_fallthru
      _
    // Predicated region
    $region22: #{tpu_custom_call.1} parent=1 // pred_check
      _
    $region23: #{tpu_custom_call.1} parent=1 // pred_check_branch
      %44 = sbr.rel (0) target = $region25
    $region24: #{tpu_custom_call.1} parent=1 // pred_region
      %45 = dma.done [#allocation3], 4096
    $region25: #{tpu_custom_call.1} parent=1 // pred_fallthru
      _
    // Predicated region
    $region26: #{tpu_custom_call.1} parent=1 // pred_check
      _
    $region27: #{tpu_custom_call.1} parent=1 // pred_check_branch
      %47 = sbr.rel (0) target = $region29
    $region28: #{tpu_custom_call.1} parent=1 // pred_region
      %48 = dma.done [#allocation6], 2048
    $region29: #{tpu_custom_call.1} parent=1 // pred_fallthru
      _
    %v49 = vld [vmem:[%s0] sm:$0xff]
    %v50 = vlaneseq
    %v51 = vand.u32 %v50, 127
    %v52 = vcvt.s32.f32 %v51
    %v53 = vmul.f32 %v52, -0.071955785
    %v54 = vmul.f32 %v53, 1.442695
    %v55 = vpow.pop %v54
    %57 = vset.pattern.permute.xlu0 0
    %58 = vperm.xlu0 %57, %v49
    %v59 = vpop.permute.xlu0 %58
    %v61 = vmul.f32 %v59, %v55
    %v62 = vand.u32 2147483647, %v61
    %vm63 = vcmp.le.f32.partialorder %v62, 0.7853982
    %vm64 = vcmp.lt.s32.totalorder %v61, 0
    %v65 = vand.u32 %v61, 2139095040
    %v66 = vshrl.u32 %v65, 23
    %v67 = vsub.s32 %v66, 127
    %v68 = vand.u32 2147483647, %v61
    %v69 = vand.u32 %v68, 8388607
    %v70 = vor.u32 %v69, 8388608
    %v71 = vsub.s32 0, %v70
    %v72 = vadd.s32 %v67, 1
    %vm73 = vcmp.gt.s32.totalorder %v72, 0
    %v74 = vsel %vm73, %v72, 0
    %v75 = vshrl.u32 %v74, 5
    %v76 = vand.u32 %v74, 31
    %v77 = vsub.s32 32, %v76
    %v78 = vshrl.u32 683565275, %v77
    %v79 = vshll.u32 683565275, %v76
    %v80 = vshrl.u32 2475754826, %v77
    %v81 = vor.u32 %v79, %v80
    %v82 = vshll.u32 2475754826, %v76
    %v83 = vshrl.u32 2131351028, %v77
    %v84 = vor.u32 %v82, %v83
    %v85 = vshll.u32 2131351028, %v76
    %v86 = vshrl.u32 2102212464, %v77
    %v87 = vor.u32 %v85, %v86
    %v88 = vshll.u32 2102212464, %v76
    %v89 = vshrl.u32 920167782, %v77
    %v90 = vor.u32 %v88, %v89
    %v91 = vshll.u32 920167782, %v76
    %v92 = vshrl.u32 1326507024, %v77
    %v93 = vor.u32 %v91, %v92
    %vm94 = vcmp.lt.s32.totalorder %v75, 1
    %vm95 = vcmp.lt.s32.totalorder %v75, 2
    %vm96 = vcmp.lt.s32.totalorder %v75, 3
    %vm97 = vcmp.lt.s32.totalorder %v75, 4
    %v98 = vsel %vm94, %v78, %v81
    %v99 = vsel %vm97, %v87, 2102212464
    %v100 = vsel %vm96, %v84, %v99
    %v101 = vsel %vm95, %v98, %v100
    %v102 = vsel %vm94, %v81, %v84
    %v103 = vsel %vm97, %v90, 920167782
    %v104 = vsel %vm96, %v87, %v103
    %v105 = vsel %vm95, %v102, %v104
    %v106 = vsel %vm94, %v84, %v87
    %v107 = vsel %vm97, %v93, 1326507024
    %v108 = vsel %vm96, %v90, %v107
    %v109 = vsel %vm95, %v106, %v108
    %v110 = vshll.u32 %v70, 8
    %v111 = vmul.u32.u64.compose %v110, %v109
    %v112 = vextract.low.u32 %v111
    %v113 = vextract.high.u32 %v111
    %v114 = vmul.u32.u64.compose %v110, %v105
    %v115 = vextract.low.u32 %v114
    %v116 = vextract.high.u32 %v114
    %v117 = vmul.u32 %v110, %v101
    %v118 = vadd.s32 %v113, %v115
    %vm119 = vc.u32 %v113, %v115
    %v120 = vadd.s32 %v116, 1
    %v121 = vsel %vm119, %v120, %v116
    %v122 = vadd.s32 %v117, %v121
    %v123 = vadd.s32 %v122, 536870912
    %v124 = vshrl.u32 %v123, 30
    %v125 = vshll.u32 %v124, 30
    %v126 = vsub.s32 %v122, %v125
    %vm127 = vcmp.lt.s32.totalorder %v126, 0
    %v128 = vsub.s32 0, %v126
    %v129 = vsel %vm127, %v128, %v126
    %v130 = vclz %v129
    %v131 = vsub.s32 %v130, 2
    %vm132 = vcmp.gt.s32.totalorder 0, %v131
    %v133 = vsel %vm132, 0, %v131
    %v134 = vsub.s32 32, %v133
    %v135 = vshll.u32 %v126, %v133
    %v136 = vshrl.u32 %v118, %v134
    %v137 = vor.u32 %v135, %v136
    %v138 = vsub.s32 4294967266, %v133
    %v139 = vadd.s32 %v138, 127
    %v140 = vshll.u32 %v139, 23
    %v141 = vor.u32 4788187, %v140
    %v142 = vand.u32 2147483647, %v141
    %v144 = vcvt.s32.f32 %v137
    %v145 = vmul.f32 %v144, %v142
    %v146 = vxor.u32 %v145, 2147483648
    %v147 = vsel %vm64, %v146, %v145
    %v148 = vsub.s32 4, %v124
    %v149 = vsel %vm64, %v148, %v124
    %v150 = vsel %vm63, %v61, %v147
    %v151 = vsel %vm63, 0, %v149
    %v152 = vcosq.f32.pop %v150
    %v153 = vsinq.f32.pop %v150
    %vm154 = vweird.f32 %v61
    %v155 = vand.u32 %v151, 3
    %vm156 = vcmp.lt.s32.totalorder %v155, 2
    %vm157 = vcmp.eq.s32.totalorder %v155, 0
    %v158 = vxor.u32 %v153, 2147483648
    %v159 = vsel %vm157, %v152, %v158
    %vm160 = vcmp.eq.s32.totalorder %v155, 2
    %v161 = vxor.u32 %v152, 2147483648
    %v162 = vsel %vm160, %v161, %v153
    %v163 = vsel %vm156, %v159, %v162
    %v164 = vsel %vm154, nan, %v163
    %v165 = vand.u32 2147483647, %v61
    %vm166 = vcmp.le.f32.partialorder %v165, 0.7853982
    %vm167 = vcmp.lt.s32.totalorder %v61, 0
    %v168 = vand.u32 %v61, 2139095040
    %v169 = vshrl.u32 %v168, 23
    %v170 = vsub.s32 %v169, 127
    %v171 = vand.u32 2147483647, %v61
    %v172 = vand.u32 %v171, 8388607
    %v173 = vor.u32 %v172, 8388608
    %v174 = vsub.s32 0, %v173
    %v175 = vadd.s32 %v170, 1
    %vm176 = vcmp.gt.s32.totalorder %v175, 0
    %v177 = vsel %vm176, %v175, 0
    %v178 = vshrl.u32 %v177, 5
    %v179 = vand.u32 %v177, 31
    %v180 = vsub.s32 32, %v179
    %v181 = vshrl.u32 683565275, %v180
    %v182 = vshll.u32 683565275, %v179
    %v183 = vshrl.u32 2475754826, %v180
    %v184 = vor.u32 %v182, %v183
    %v185 = vshll.u32 2475754826, %v179
    %v186 = vshrl.u32 2131351028, %v180
    %v187 = vor.u32 %v185, %v186
    %v188 = vshll.u32 2131351028, %v179
    %v189 = vshrl.u32 2102212464, %v180
    %v190 = vor.u32 %v188, %v189
    %v191 = vshll.u32 2102212464, %v179
    %v192 = vshrl.u32 920167782, %v180
    %v193 = vor.u32 %v191, %v192
    %v194 = vshll.u32 920167782, %v179
    %v195 = vshrl.u32 1326507024, %v180
    %v196 = vor.u32 %v194, %v195
    %vm197 = vcmp.lt.s32.totalorder %v178, 1
    %vm198 = vcmp.lt.s32.totalorder %v178, 2
    %vm199 = vcmp.lt.s32.totalorder %v178, 3
    %vm200 = vcmp.lt.s32.totalorder %v178, 4
    %v201 = vsel %vm197, %v181, %v184
    %v202 = vsel %vm200, %v190, 2102212464
    %v203 = vsel %vm199, %v187, %v202
    %v204 = vsel %vm198, %v201, %v203
    %v205 = vsel %vm197, %v184, %v187
    %v206 = vsel %vm200, %v193, 920167782
    %v207 = vsel %vm199, %v190, %v206
    %v208 = vsel %vm198, %v205, %v207
    %v209 = vsel %vm197, %v187, %v190
    %v210 = vsel %vm200, %v196, 1326507024
    %v211 = vsel %vm199, %v193, %v210
    %v212 = vsel %vm198, %v209, %v211
    %v213 = vshll.u32 %v173, 8
    %v214 = vmul.u32.u64.compose %v213, %v212
    %v215 = vextract.low.u32 %v214
    %v216 = vextract.high.u32 %v214
    %v217 = vmul.u32.u64.compose %v213, %v208
    %v218 = vextract.low.u32 %v217
    %v219 = vextract.high.u32 %v217
    %v220 = vmul.u32 %v213, %v204
    %v221 = vadd.s32 %v216, %v218
    %vm222 = vc.u32 %v216, %v218
    %v223 = vadd.s32 %v219, 1
    %v224 = vsel %vm222, %v223, %v219
    %v225 = vadd.s32 %v220, %v224
    %v226 = vadd.s32 %v225, 536870912
    %v227 = vshrl.u32 %v226, 30
    %v228 = vshll.u32 %v227, 30
    %v229 = vsub.s32 %v225, %v228
    %vm230 = vcmp.lt.s32.totalorder %v229, 0
    %v231 = vsub.s32 0, %v229
    %v232 = vsel %vm230, %v231, %v229
    %v233 = vclz %v232
    %v234 = vsub.s32 %v233, 2
    %vm235 = vcmp.gt.s32.totalorder 0, %v234
    %v236 = vsel %vm235, 0, %v234
    %v237 = vsub.s32 32, %v236
    %v238 = vshll.u32 %v229, %v236
    %v239 = vshrl.u32 %v221, %v237
    %v240 = vor.u32 %v238, %v239
    %v241 = vsub.s32 4294967266, %v236
    %v242 = vadd.s32 %v241, 127
    %v243 = vshll.u32 %v242, 23
    %v244 = vor.u32 4788187, %v243
    %v245 = vand.u32 2147483647, %v244
    %v247 = vcvt.s32.f32 %v240
    %v248 = vmul.f32 %v247, %v245
    %v249 = vxor.u32 %v248, 2147483648
    %v250 = vsel %vm167, %v249, %v248
    %v251 = vsub.s32 4, %v227
    %v252 = vsel %vm167, %v251, %v227
    %v253 = vsel %vm166, %v61, %v250
    %v254 = vsel %vm166, 0, %v252
    %v255 = vcosq.f32.pop %v253
    %v256 = vsinq.f32.pop %v253
    %vm257 = vweird.f32 %v61
    %v258 = vadd.s32 %v254, 3
    %v259 = vand.u32 %v258, 3
    %vm260 = vcmp.lt.s32.totalorder %v259, 2
    %vm261 = vcmp.eq.s32.totalorder %v259, 0
    %v262 = vxor.u32 %v256, 2147483648
    %v263 = vsel %vm261, %v255, %v262
    %vm264 = vcmp.eq.s32.totalorder %v259, 2
    %v265 = vxor.u32 %v255, 2147483648
    %v266 = vsel %vm264, %v265, %v256
    %v267 = vsel %vm260, %v263, %v266
    %v268 = vsel %vm257, nan, %v267
    %v269 = vld [vmem:[#allocation2] sm:$0xff]
    %v270 = vld [vmem:[#allocation2 + $0x8] sm:$0xff]
    %v271 = vld [vmem:[#allocation2 + $0x10] sm:$0xff]
    %v272 = vld [vmem:[#allocation2 + $0x18] sm:$0xff]
    %v273 = vld [vmem:[#allocation2 + $0x20] sm:$0xff]
    %v274 = vld [vmem:[#allocation2 + $0x28] sm:$0xff]
    %v275 = vld [vmem:[#allocation2 + $0x30] sm:$0xff]
    %v276 = vld [vmem:[#allocation2 + $0x38] sm:$0xff]
    %v277 = vld [vmem:[#allocation2 + $0x40] sm:$0xff]
    %v278 = vld [vmem:[#allocation2 + $0x48] sm:$0xff]
    %v279 = vld [vmem:[#allocation2 + $0x50] sm:$0xff]
    %v280 = vld [vmem:[#allocation2 + $0x58] sm:$0xff]
    %v281 = vld [vmem:[#allocation2 + $0x60] sm:$0xff]
    %v282 = vld [vmem:[#allocation2 + $0x68] sm:$0xff]
    %v283 = vld [vmem:[#allocation2 + $0x70] sm:$0xff]
    %v284 = vld [vmem:[#allocation2 + $0x78] sm:$0xff]
    %v285 = vld [vmem:[#allocation2 + $0x80] sm:$0xff]
    %v286 = vld [vmem:[#allocation2 + $0x88] sm:$0xff]
    %v287 = vld [vmem:[#allocation2 + $0x90] sm:$0xff]
    %v288 = vld [vmem:[#allocation2 + $0x98] sm:$0xff]
    %v289 = vld [vmem:[#allocation2 + $0xa0] sm:$0xff]
    %v290 = vld [vmem:[#allocation2 + $0xa8] sm:$0xff]
    %v291 = vld [vmem:[#allocation2 + $0xb0] sm:$0xff]
    %v292 = vld [vmem:[#allocation2 + $0xb8] sm:$0xff]
    %v293 = vld [vmem:[#allocation2 + $0xc0] sm:$0xff]
    %v294 = vld [vmem:[#allocation2 + $0xc8] sm:$0xff]
    %v295 = vld [vmem:[#allocation2 + $0xd0] sm:$0xff]
    %v296 = vld [vmem:[#allocation2 + $0xd8] sm:$0xff]
    %v297 = vld [vmem:[#allocation2 + $0xe0] sm:$0xff]
    %v298 = vld [vmem:[#allocation2 + $0xe8] sm:$0xff]
    %v299 = vld [vmem:[#allocation2 + $0xf0] sm:$0xff]
    %v300 = vld [vmem:[#allocation2 + $0xf8] sm:$0xff]
    %301 = vmatprep.subr.mxu0 0.0
    %302 = vmatpush1.msra.mxu0 %v285
    %303 = vmatprep.subr.mxu0 0.0
    %304 = vmatpush1.msra.mxu0 %v286
    %305 = vmatprep.subr.mxu0 0.0
    %306 = vmatpush1.msra.mxu0 %v287
    %307 = vmatprep.subr.mxu0 0.0
    %308 = vmatpush1.msra.mxu0 %v288
    %309 = vmatprep.subr.mxu0 0.0
    %310 = vmatpush1.msra.mxu0 %v289
    %311 = vmatprep.subr.mxu0 0.0
    %312 = vmatpush1.msra.mxu0 %v290
    %313 = vmatprep.subr.mxu0 0.0
    %314 = vmatpush1.msra.mxu0 %v291
    %315 = vmatprep.subr.mxu0 0.0
    %316 = vmatpush1.msra.mxu0 %v292
    %317 = vmatprep.subr.mxu0 0.0
    %318 = vmatpush1.msra.mxu0 %v293
    %319 = vmatprep.subr.mxu0 0.0
    %320 = vmatpush1.msra.mxu0 %v294
    %321 = vmatprep.subr.mxu0 0.0
    %322 = vmatpush1.msra.mxu0 %v295
    %323 = vmatprep.subr.mxu0 0.0
    %324 = vmatpush1.msra.mxu0 %v296
    %325 = vmatprep.subr.mxu0 0.0
    %326 = vmatpush1.msra.mxu0 %v297
    %327 = vmatprep.subr.mxu0 0.0
    %328 = vmatpush1.msra.mxu0 %v298
    %329 = vmatprep.subr.mxu0 0.0
    %330 = vmatpush1.msra.mxu0 %v299
    %331 = vmatprep.subr.mxu0 0.0
    %332 = vmatpush1.msra.mxu0 %v300
    %333 = vmatprep.subr.mxu0 0.0
    %334 = vmatpush1.msra.mxu0 0.0
    %335 = vmatprep.subr.mxu0 0.0
    %336 = vmatpush1.msra.mxu0 0.0
    %337 = vmatprep.subr.mxu0 0.0
    %338 = vmatpush1.msra.mxu0 0.0
    %339 = vmatprep.subr.mxu0 0.0
    %340 = vmatpush1.msra.mxu0 0.0
    %341 = vmatprep.subr.mxu0 0.0
    %342 = vmatpush1.msra.mxu0 0.0
    %343 = vmatprep.subr.mxu0 0.0
    %344 = vmatpush1.msra.mxu0 0.0
    %345 = vmatprep.subr.mxu0 0.0
    %346 = vmatpush1.msra.mxu0 0.0
    %347 = vmatprep.subr.mxu0 0.0
    %348 = vmatpush1.msra.mxu0 0.0
    %349 = vmatprep.subr.mxu0 0.0
    %350 = vmatpush1.msra.mxu0 0.0
    %351 = vmatprep.subr.mxu0 0.0
    %352 = vmatpush1.msra.mxu0 0.0
    %353 = vmatprep.subr.mxu0 0.0
    %354 = vmatpush1.msra.mxu0 0.0
    %355 = vmatprep.subr.mxu0 0.0
    %356 = vmatpush1.msra.mxu0 0.0
    %357 = vmatprep.subr.mxu0 0.0
    %358 = vmatpush1.msra.mxu0 0.0
    %359 = vmatprep.subr.mxu0 0.0
    %360 = vmatpush1.msra.mxu0 0.0
    %361 = vmatprep.subr.mxu0 0.0
    %362 = vmatpush1.msra.mxu0 0.0
    %363 = vmatprep.subr.mxu0 0.0
    %364 = vmatpush1.msra.mxu0 0.0
    %365 = vmatprep.mubr.f32.mxu0 0.0
    %366 = vmatmul.mubr.f32.gmra.mrb[0].mxu0 %v268
    %v367 = vpop.f32.mrb[0].mxu0
    %v368 = vadd.f32 0.0, %v367
    %v369 = vpop.f32.mrb[0].mxu0
    %370 = vdwg.mxu0
    %371 = vmatprep.subr.mxu0 0.0
    %372 = vmatpush1.msra.mxu0 %v269
    %373 = vmatprep.subr.mxu0 0.0
    %374 = vmatpush1.msra.mxu0 %v270
    %375 = vmatprep.subr.mxu0 0.0
    %376 = vmatpush1.msra.mxu0 %v271
    %377 = vmatprep.subr.mxu0 0.0
    %378 = vmatpush1.msra.mxu0 %v272
    %379 = vmatprep.subr.mxu0 0.0
    %380 = vmatpush1.msra.mxu0 %v273
    %381 = vmatprep.subr.mxu0 0.0
    %382 = vmatpush1.msra.mxu0 %v274
    %383 = vmatprep.subr.mxu0 0.0
    %384 = vmatpush1.msra.mxu0 %v275
    %385 = vmatprep.subr.mxu0 0.0
    %386 = vmatpush1.msra.mxu0 %v276
    %387 = vmatprep.subr.mxu0 0.0
    %388 = vmatpush1.msra.mxu0 %v277
    %389 = vmatprep.subr.mxu0 0.0
    %390 = vmatpush1.msra.mxu0 %v278
    %391 = vmatprep.subr.mxu0 0.0
    %392 = vmatpush1.msra.mxu0 %v279
    %393 = vmatprep.subr.mxu0 0.0
    %394 = vmatpush1.msra.mxu0 %v280
    %395 = vmatprep.subr.mxu0 0.0
    %396 = vmatpush1.msra.mxu0 %v281
    %397 = vmatprep.subr.mxu0 0.0
    %398 = vmatpush1.msra.mxu0 %v282
    %399 = vmatprep.subr.mxu0 0.0
    %400 = vmatpush1.msra.mxu0 %v283
    %401 = vmatprep.subr.mxu0 0.0
    %402 = vmatpush1.msra.mxu0 %v284
    %403 = vmatprep.subr.mxu0 0.0
    %404 = vmatpush1.msra.mxu0 0.0
    %405 = vmatprep.subr.mxu0 0.0
    %406 = vmatpush1.msra.mxu0 0.0
    %407 = vmatprep.subr.mxu0 0.0
    %408 = vmatpush1.msra.mxu0 0.0
    %409 = vmatprep.subr.mxu0 0.0
    %410 = vmatpush1.msra.mxu0 0.0
    %411 = vmatprep.subr.mxu0 0.0
    %412 = vmatpush1.msra.mxu0 0.0
    %413 = vmatprep.subr.mxu0 0.0
    %414 = vmatpush1.msra.mxu0 0.0
    %415 = vmatprep.subr.mxu0 0.0
    %416 = vmatpush1.msra.mxu0 0.0
    %417 = vmatprep.subr.mxu0 0.0
    %418 = vmatpush1.msra.mxu0 0.0
    %419 = vmatprep.subr.mxu0 0.0
    %420 = vmatpush1.msra.mxu0 0.0
    %421 = vmatprep.subr.mxu0 0.0
    %422 = vmatpush1.msra.mxu0 0.0
    %423 = vmatprep.subr.mxu0 0.0
    %424 = vmatpush1.msra.mxu0 0.0
    %425 = vmatprep.subr.mxu0 0.0
    %426 = vmatpush1.msra.mxu0 0.0
    %427 = vmatprep.subr.mxu0 0.0
    %428 = vmatpush1.msra.mxu0 0.0
    %429 = vmatprep.subr.mxu0 0.0
    %430 = vmatpush1.msra.mxu0 0.0
    %431 = vmatprep.subr.mxu0 0.0
    %432 = vmatpush1.msra.mxu0 0.0
    %433 = vmatprep.subr.mxu0 0.0
    %434 = vmatpush1.msra.mxu0 0.0
    %435 = vmatprep.mubr.f32.mxu0 0.0
    %436 = vmatmul.mubr.f32.gmra.mrb[0].mxu0 %v164
    %v437 = vpop.f32.mrb[0].mxu0
    %v438 = vadd.f32 %v368, %v437
    %v439 = vpop.f32.mrb[0].mxu0
    %440 = vdwg.mxu0
    %v441 = vld [vmem:[%s2] sm:$0x1]
    %v443 = vlaneseq
    %v444 = vshrl.u32 %v443, 7
    %v445 = vsub.s32 0, %v444
    %v446 = vrot.slane %v441, %v445
    %v448 = vadd.f32 %v438, %v446
    %v449 = vxor.u32 %v448, 2147483648
    %v450 = vmul.f32 %v449, 1.442695
    %v451 = vpow.pop %v450
    %v452 = vadd.f32 %v451, 1.0
    %v453 = vrcp.pop %v452
    %v454 = vmul.f32 1.0, %v453
    %v455 = vmul.f32 %v448, %v454
    %v456 = vld [vmem:[#allocation5] sm:$0xff]
    %v457 = vld [vmem:[#allocation5 + $0x8] sm:$0xff]
    %v458 = vld [vmem:[#allocation5 + $0x10] sm:$0xff]
    %v459 = vld [vmem:[#allocation5 + $0x18] sm:$0xff]
    %v460 = vld [vmem:[#allocation5 + $0x20] sm:$0xff]
    %v461 = vld [vmem:[#allocation5 + $0x28] sm:$0xff]
    %v462 = vld [vmem:[#allocation5 + $0x30] sm:$0xff]
    %v463 = vld [vmem:[#allocation5 + $0x38] sm:$0xff]
    %v464 = vld [vmem:[#allocation5 + $0x40] sm:$0xff]
    %v465 = vld [vmem:[#allocation5 + $0x48] sm:$0xff]
    %v466 = vld [vmem:[#allocation5 + $0x50] sm:$0xff]
    %v467 = vld [vmem:[#allocation5 + $0x58] sm:$0xff]
    %v468 = vld [vmem:[#allocation5 + $0x60] sm:$0xff]
    %v469 = vld [vmem:[#allocation5 + $0x68] sm:$0xff]
    %v470 = vld [vmem:[#allocation5 + $0x70] sm:$0xff]
    %v471 = vld [vmem:[#allocation5 + $0x78] sm:$0xff]
    %v472 = vld [vmem:[%s4] sm:$0x1]
    %v474 = vlaneseq
    %v475 = vshrl.u32 %v474, 7
    %v476 = vsub.s32 0, %v475
    %v477 = vrot.slane %v472, %v476
    %479 = vmatprep.subr.mxu0 0.0
    %480 = vmatpush1.msra.mxu0 %v456
    %481 = vmatprep.subr.mxu0 0.0
    %482 = vmatpush1.msra.mxu0 %v457
    %483 = vmatprep.subr.mxu0 0.0
    %484 = vmatpush1.msra.mxu0 %v458
    %485 = vmatprep.subr.mxu0 0.0
    %486 = vmatpush1.msra.mxu0 %v459
    %487 = vmatprep.subr.mxu0 0.0
    %488 = vmatpush1.msra.mxu0 %v460
    %489 = vmatprep.subr.mxu0 0.0
    %490 = vmatpush1.msra.mxu0 %v461
    %491 = vmatprep.subr.mxu0 0.0
    %492 = vmatpush1.msra.mxu0 %v462
    %493 = vmatprep.subr.mxu0 0.0
    %494 = vmatpush1.msra.mxu0 %v463
    %495 = vmatprep.subr.mxu0 0.0
    %496 = vmatpush1.msra.mxu0 %v464
    %497 = vmatprep.subr.mxu0 0.0
    %498 = vmatpush1.msra.mxu0 %v465
    %499 = vmatprep.subr.mxu0 0.0
    %500 = vmatpush1.msra.mxu0 %v466
    %501 = vmatprep.subr.mxu0 0.0
    %502 = vmatpush1.msra.mxu0 %v467
    %503 = vmatprep.subr.mxu0 0.0
    %504 = vmatpush1.msra.mxu0 %v468
    %505 = vmatprep.subr.mxu0 0.0
    %506 = vmatpush1.msra.mxu0 %v469
    %507 = vmatprep.subr.mxu0 0.0
    %508 = vmatpush1.msra.mxu0 %v470
    %509 = vmatprep.subr.mxu0 0.0
    %510 = vmatpush1.msra.mxu0 %v471
    %511 = vmatprep.subr.mxu0 0.0
    %512 = vmatpush1.msra.mxu0 0.0
    %513 = vmatprep.subr.mxu0 0.0
    %514 = vmatpush1.msra.mxu0 0.0
    %515 = vmatprep.subr.mxu0 0.0
    %516 = vmatpush1.msra.mxu0 0.0
    %517 = vmatprep.subr.mxu0 0.0
    %518 = vmatpush1.msra.mxu0 0.0
    %519 = vmatprep.subr.mxu0 0.0
    %520 = vmatpush1.msra.mxu0 0.0
    %521 = vmatprep.subr.mxu0 0.0
    %522 = vmatpush1.msra.mxu0 0.0
    %523 = vmatprep.subr.mxu0 0.0
    %524 = vmatpush1.msra.mxu0 0.0
    %525 = vmatprep.subr.mxu0 0.0
    %526 = vmatpush1.msra.mxu0 0.0
    %527 = vmatprep.subr.mxu0 0.0
    %528 = vmatpush1.msra.mxu0 0.0
    %529 = vmatprep.subr.mxu0 0.0
    %530 = vmatpush1.msra.mxu0 0.0
    %531 = vmatprep.subr.mxu0 0.0
    %532 = vmatpush1.msra.mxu0 0.0
    %533 = vmatprep.subr.mxu0 0.0
    %534 = vmatpush1.msra.mxu0 0.0
    %535 = vmatprep.subr.mxu0 0.0
    %536 = vmatpush1.msra.mxu0 0.0
    %537 = vmatprep.subr.mxu0 0.0
    %538 = vmatpush1.msra.mxu0 0.0
    %539 = vmatprep.subr.mxu0 0.0
    %540 = vmatpush1.msra.mxu0 0.0
    %541 = vmatprep.subr.mxu0 0.0
    %542 = vmatpush1.msra.mxu0 0.0
    %543 = vmatprep.mubr.f32.mxu0 0.0
    %544 = vmatmul.mubr.f32.gmra.mrb[0].mxu0 %v455
    %v545 = vpop.f32.mrb[0].mxu0
    %v546 = vadd.f32 %v477, %v545
    %v547 = vpop.f32.mrb[0].mxu0
    %548 = vdwg.mxu0
    %549 = vst [vmem:[#allocation7] sm:$0xff] %v546
    // Predicated region
    $region30: #{tpu_custom_call.1} parent=1 // pred_check
      _
    $region31: #{tpu_custom_call.1} parent=1 // pred_check_branch
      %551 = sbr.rel (0) target = $region33
    $region32: #{tpu_custom_call.1} parent=1 // pred_region
      %s553 = ssub.s32 128, 128
      %554 = vsyncadd [#allocation4], %s553
      %s556 = sshll.u32 [#allocation7], 4
      %s557 = int_to_ptr.vmem [resolvable:$true] %s556
      %559 = dma.vmem_to_hbm [thread:$0]  %s557, 128, %s5, [#allocation4]
    $region33: #{tpu_custom_call.1} parent=1 // pred_fallthru
      _
    // Predicated region
    $region34: #{tpu_custom_call.1} parent=1 // pred_check
      _
    $region35: #{tpu_custom_call.1} parent=1 // pred_check_branch
      %561 = sbr.rel (0) target = $region37
    $region36: #{tpu_custom_call.1} parent=1 // pred_region
      %562 = dma.done [#allocation4], 128
    $region37: #{tpu_custom_call.1} parent=1 // pred_fallthru
      _
    %563 = vsyncpa [#allocation3], 1
    %564 = vsyncpa [#allocation6], 1
    %565 = vsyncpa [#allocation4], 1

</llo_original>
